<compile_context>
chip_gen: v5e
topology: v5e:2x2
jax: 0.10.0
libtpu: 0.0.40
codegen_flags: <defaults>
</compile_context>

<pallas_src>
import functools

import jax
import jax.numpy as jnp
from jax import lax
from jax.experimental import pallas as pl
from jax.experimental.pallas import tpu as pltpu


def _round_up(x, m):
    return (x + m - 1) // m * m


# --------------------------------------------------------------------------- #
# VMEM budgets (generation-safe: fits v7x's 64 MiB per-TC VMEM; raised when a
# 128 MiB part is detected).
# --------------------------------------------------------------------------- #
def _vmem_limits():
    limit, budget = 44 * 1024 * 1024, 28 * 1024 * 1024   # safe everywhere (incl. v7x)
    try:
        cap = int(pltpu.get_tpu_info().vmem_capacity_bytes)
        if cap >= 100 * 1024 * 1024:                       # v5e / v6e: 128 MiB
            limit, budget = 80 * 1024 * 1024, 48 * 1024 * 1024
    except Exception:
        pass
    return limit, budget


def _pick_hw_tile(hw_pad, bytes_per_lane, budget):
    """Largest lane tile (multiple of 128 dividing hw_pad) fitting the budget.
    bytes_per_lane already includes double-buffering and in-kernel scratch."""
    candidates = [t for t in (2048, 1024, 512, 256, 128) if hw_pad % t == 0]
    if not candidates:
        return hw_pad
    for t in candidates:
        if t * bytes_per_lane <= budget:
            return t
    return candidates[-1]


# --------------------------------------------------------------------------- #
# pltpu.roll direction calibration (one tiny kernel, cached).
# --------------------------------------------------------------------------- #
_ROLL_IS_JNP = None


def _roll_matches_jnp():
    global _ROLL_IS_JNP
    if _ROLL_IS_JNP is None:
        def _k(x_ref, o_ref):
            o_ref[...] = pltpu.roll(x_ref[...], 1, 1)

        x = jnp.tile(jnp.arange(128, dtype=jnp.float32)[None, :], (8, 1))
        out = pl.pallas_call(
            _k, out_shape=jax.ShapeDtypeStruct((8, 128), jnp.float32))(x)
        _ROLL_IS_JNP = bool(jnp.allclose(out, jnp.roll(x, 1, axis=1)))
    return _ROLL_IS_JNP


# --------------------------------------------------------------------------- #
# Kernel A: dilated coarse correlation + online softmax + expected offset.
# --------------------------------------------------------------------------- #
def coarse_offset_kernel(t_ref, rp_ref, off_ref, *, P_m, R_m, dirate, h, w_pad,
                         shift_lane):
    """
    t_ref  : (1, C, h, w_pad)          f32 target features (zero lane-padding)
    rp_ref : (1, C, Hp_pad, Wp_pad)    f32 reference with zero halo (+ alignment pad)
    off_ref: (1, 2, h, w_pad)          f32 [x, y] expected offsets
    """
    t = t_ref[0]                                    # (C, h, w_pad)
    rp = rp_ref[0]                                  # (C, Hp_pad, Wp_pad)

    m = jnp.full((h, w_pad), -1e30, dtype=jnp.float32)
    s = jnp.zeros((h, w_pad), jnp.float32)
    sx = jnp.zeros((h, w_pad), jnp.float32)
    sy = jnp.zeros((h, w_pad), jnp.float32)

    for di in range(P_m):                           # small unrolled row loop
        y0 = di * dirate
        band0 = rp[:, y0:y0 + h, :]                 # (C, h, Wp_pad), static slice
        dy = float(di - R_m)

        def body(dj, carry, dy=dy):
            cb, m_, s_, sx_, sy_ = carry
            # column shift dj*dirate already applied to cb via incremental roll
            corr = jnp.sum(t * cb[:, :, :w_pad], axis=0)       # (h, w_pad)
            dx = (dj - R_m).astype(jnp.float32)
            m_new = jnp.maximum(m_, corr)
            alpha = jnp.exp(m_ - m_new)
            e = jnp.exp(corr - m_new)
            s_new = alpha * s_ + e
            sx_new = alpha * sx_ + e * dx
            sy_new = alpha * sy_ + e * dy
            cb_next = pltpu.roll(cb, shift_lane, 2)            # XLU lane rotate
            return cb_next, m_new, s_new, sx_new, sy_new

        _, m, s, sx, sy = lax.fori_loop(0, P_m, body, (band0, m, s, sx, sy))

    inv = 1.0 / s                                   # exact: feeds sampling coords
    scale = float(dirate)
    off_x = sx * inv * scale
    off_y = sy * inv * scale
    off_ref[0] = jnp.stack([off_x, off_y], axis=0)


def coarse_offset_pallas(t_pad, r_pad, dirate, *, P_m, R_m, h, w_pad,
                         vmem_limit, roll_is_jnp):
    b, C = t_pad.shape[0], t_pad.shape[1]
    Hp_pad, Wp_pad = r_pad.shape[2], r_pad.shape[3]
    # we need rolled[j] = x[j + dirate]; pick the shift matching the HW convention
    shift_lane = (Wp_pad - dirate) % Wp_pad if roll_is_jnp else dirate % Wp_pad
    kernel = functools.partial(coarse_offset_kernel, P_m=P_m, R_m=R_m,
                               dirate=dirate, h=h, w_pad=w_pad,
                               shift_lane=shift_lane)
    # TODO(synk): h-tiling (with halo bands) would shrink the VMEM footprint for
    # very large C*h*w reference maps; whole-frame blocks are fine at these sizes.
    return pl.pallas_call(
        kernel,
        out_shape=jax.ShapeDtypeStruct((b, 2, h, w_pad), jnp.float32),
        grid=(b,),
        in_specs=[
            pl.BlockSpec((1, C, h, w_pad), lambda i: (i, 0, 0, 0)),
            pl.BlockSpec((1, C, Hp_pad, Wp_pad), lambda i: (i, 0, 0, 0)),
        ],
        out_specs=pl.BlockSpec((1, 2, h, w_pad), lambda i: (i, 0, 0, 0)),
        compiler_params=pltpu.CompilerParams(
            dimension_semantics=("parallel",),
            vmem_limit_bytes=vmem_limit),
    )(t_pad, r_pad)


# --------------------------------------------------------------------------- #
# Kernel B: fused multi-reference pixel correlation + softmax over all
# nsearch * P * P candidates, tiled over the h*w lane axis.
# --------------------------------------------------------------------------- #
def corr_softmax_kernel(*refs, C, N, nsearch, chunk):
    """
    refs = (t_ref, col_ref_0, ..., col_ref_{nsearch-1}, out_ref)
    t_ref     : (1, C, HW_T)              f32
    col_ref_i : (1, C, N, HW_T)           bf16 deformable columns for reference i
    out_ref   : (1, nsearch, N, HW_T)     f32 softmax over all nsearch*N candidates
    """
    t_ref = refs[0]
    col_refs = refs[1:1 + nsearch]
    out_ref = refs[1 + nsearch]

    t = t_ref[0]                                    # (C, T) f32
    T = t.shape[-1]
    # one-time sublane-broadcast copy of t used by every candidate chunk
    tb = jnp.broadcast_to(t[:, None, :], (C, chunk, T))

    # -- pass 1: raw correlations, written straight into the output block ----
    for si in range(nsearch):
        col = col_refs[si]
        for k0 in range(0, N, chunk):
            ch = min(chunk, N - k0)
            acc0 = col[0, 0, k0:k0 + ch, :].astype(jnp.float32) * tb[0, :ch, :]
            acc1 = None
            if C > 1:
                acc1 = col[0, 1, k0:k0 + ch, :].astype(jnp.float32) * tb[1, :ch, :]
            for ci in range(2, C):
                term = col[0, ci, k0:k0 + ch, :].astype(jnp.float32) * tb[ci, :ch, :]
                if ci % 2 == 0:
                    acc0 = acc0 + term
                else:
                    acc1 = acc1 + term
            seg = acc0 if acc1 is None else acc0 + acc1
            out_ref[0, si, k0:k0 + ch, :] = seg

    # -- pass 2: softmax over all nsearch*N candidates ------------------------
    raw = out_ref[0]                                # (nsearch, N, T) f32
    m = jnp.max(raw, axis=(0, 1), keepdims=True)
    e = jnp.exp(raw - m)
    s = jnp.sum(e, axis=(0, 1), keepdims=True)
    out_ref[0] = e / s                              # exact divide: must sum to 1


def corr_softmax_pallas(t_flat, cols, *, vmem_limit, budget):
    b, C, hw_pad = t_flat.shape
    nsearch = len(cols)
    N = cols[0].shape[2]
    chunk = 16
    bytes_per_lane = (2 * C * 4                      # t block (f32, 2x buffered)
                      + 2 * nsearch * C * N * 2      # col blocks (bf16, 2x buffered)
                      + 2 * nsearch * N * 4          # out block (f32, 2x buffered)
                      + C * chunk * 4                # tb broadcast
                      + 3 * nsearch * N * 4)         # softmax intermediates
    hw_tile = _pick_hw_tile(hw_pad, bytes_per_lane, budget)
    grid = (b, hw_pad // hw_tile)

    kernel = functools.partial(corr_softmax_kernel, C=C, N=N,
                               nsearch=nsearch, chunk=chunk)
    in_specs = [pl.BlockSpec((1, C, hw_tile), lambda i, j: (i, 0, j))]
    in_specs += [pl.BlockSpec((1, C, N, hw_tile), lambda i, j: (i, 0, 0, j))
                 for _ in range(nsearch)]
    return pl.pallas_call(
        kernel,
        out_shape=jax.ShapeDtypeStruct((b, nsearch, N, hw_pad), jnp.float32),
        grid=grid,
        in_specs=in_specs,
        out_specs=pl.BlockSpec((1, nsearch, N, hw_tile), lambda i, j: (i, 0, 0, j)),
        compiler_params=pltpu.CompilerParams(
            dimension_semantics=("parallel", "parallel"),
            vmem_limit_bytes=vmem_limit),
    )(t_flat, *cols)


# --------------------------------------------------------------------------- #
# Plain-JAX glue: bilinear deformable column extraction.
# --------------------------------------------------------------------------- #
def deform_im2col(img, offset, P):
    """img: (b,c,h,w) f32; offset: (b,h,w,2) with [...,0]=x, [...,1]=y.
    Returns (b, c, P*P, h, w) f32, zero out of bounds (ky-major candidate order)."""
    # TODO(synk): fusing this data-dependent bilinear gather into kernel B
    # (manual DMA from HBM feats_r) would remove the dominant HBM round trip;
    # there is no clean BlockSpec expression for it, so it stays in plain JAX.
    b, c, h, w = img.shape
    R = (P - 1) // 2
    N = P * P
    ky, kx = jnp.meshgrid(jnp.arange(-R, R + 1, dtype=jnp.float32),
                          jnp.arange(-R, R + 1, dtype=jnp.float32), indexing="ij")
    ky = ky.reshape(-1)
    kx = kx.reshape(-1)
    yy = jnp.arange(h, dtype=jnp.float32)
    xx = jnp.arange(w, dtype=jnp.float32)
    sy = yy[None, None, :, None] + offset[:, None, :, :, 1] + ky[None, :, None, None]
    sx = xx[None, None, None, :] + offset[:, None, :, :, 0] + kx[None, :, None, None]
    y0 = jnp.floor(sy)
    x0 = jnp.floor(sx)
    y1 = y0 + 1.0
    x1 = x0 + 1.0
    wy1 = sy - y0
    wy0 = 1.0 - wy1
    wx1 = sx - x0
    wx0 = 1.0 - wx1
    imgf = img.reshape(b, c, h * w)

    def gather(yi, xi):
        valid = ((yi >= 0) & (yi < h) & (xi >= 0) & (xi < w)).astype(img.dtype)
        yc = jnp.clip(yi, 0, h - 1).astype(jnp.int32)
        xc = jnp.clip(xi, 0, w - 1).astype(jnp.int32)
        idx = (yc * w + xc).reshape(b, 1, -1)
        g = jnp.take_along_axis(
            imgf, jnp.broadcast_to(idx, (b, c, idx.shape[-1])), axis=2)
        return g.reshape(b, c, N, h, w) * valid[:, None]

    out = (gather(y0, x0) * (wy0 * wx0)[:, None]
           + gather(y0, x1) * (wy0 * wx1)[:, None]
           + gather(y1, x0) * (wy1 * wx0)[:, None]
           + gather(y1, x1) * (wy1 * wx1)[:, None])
    return out


# --------------------------------------------------------------------------- #
# Colorizer module (JAX)
# --------------------------------------------------------------------------- #
class Colorizer:
    def __init__(self, D=4, R=6, C=32, bsize=12, factor=3,
                 is_training=False, compact=False, semantic=False):
        self.D = D
        self.R = R
        self.C = C
        self.P = self.R * 2 + 1
        self.N = self.P * self.P
        self.memory_patch_R = self.R
        self.memory_patch_P = self.memory_patch_R * 2 + 1
        self.memory_patch_N = self.memory_patch_P * self.memory_patch_P
        self.bsize = bsize
        self.factor = factor
        self.is_training = is_training
        self.compact = compact
        self.semantic = semantic  # TODO(synk): semantic branch not exercised (default False)
        self._vmem_limit, self._tile_budget = _vmem_limits()

    # coarse dilated correlation -> softmax -> expected offset (kernel A)
    def _coarse_offset(self, feats_t32, fr32, dirate):
        b, c, h, w = feats_t32.shape
        R_m, P_m = self.memory_patch_R, self.memory_patch_P
        pad = R_m * dirate
        w_pad = _round_up(w, 128)
        Hp_pad = _round_up(h + 2 * pad, 8)
        Wp_pad = _round_up(w + 2 * pad, 128)
        t_in = jnp.pad(feats_t32, ((0, 0), (0, 0), (0, 0), (0, w_pad - w)))
        rp = jnp.pad(fr32, ((0, 0), (0, 0),
                            (pad, Hp_pad - h - pad),
                            (pad, Wp_pad - w - pad)))
        off = coarse_offset_pallas(t_in, rp, dirate, P_m=P_m, R_m=R_m,
                                   h=h, w_pad=w_pad,
                                   vmem_limit=self._vmem_limit,
                                   roll_is_jnp=_roll_matches_jnp())
        return off[:, :, :, :w]                              # (b, 2, h, w)

    def forward(self, feats_r, feats_t, quantized_r, ref_index, current_ind,
                feats_r_semantic=None, feats_t_semantic=None):
        del quantized_r, feats_r_semantic, feats_t_semantic  # unused (matches reference output)
        nsearch = len([x for x in ref_index if current_ind - x > 15])
        dirates = [min(4, (current_ind - x) // 15 + 1)
                   for x in ref_index if current_ind - x > 15]
        if nsearch == 0:
            raise ValueError("Colorizer.forward needs at least one reference with "
                             "current_ind - ref_index > 15")
        b, c, h, w = feats_t.shape
        hw = h * w
        N = self.N
        feats_t32 = feats_t.astype(jnp.float32)
        hw_pad = _round_up(hw, 512)                 # avoids the 128-lane tile fallback

        cols = []
        for si in range(nsearch):
            fr32 = feats_r[si].astype(jnp.float32)
            off = self._coarse_offset(feats_t32, fr32, dirates[si])      # (b,2,h,w)
            off_hw2 = jnp.transpose(off, (0, 2, 3, 1))                   # (b,h,w,2)
            col = deform_im2col(fr32, off_hw2, self.P)                   # (b,c,N,h,w) f32
            col = col.astype(jnp.bfloat16).reshape(b, c, N, hw)          # bf16 stream
            cols.append(jnp.pad(col, ((0, 0), (0, 0), (0, 0), (0, hw_pad - hw))))

        t_flat = jnp.pad(feats_t32.reshape(b, c, hw),
                         ((0, 0), (0, 0), (0, hw_pad - hw)))

        # Pallas kernel B: fused multi-reference correlation + softmax
        corr = corr_softmax_pallas(t_flat, cols,
                                   vmem_limit=self._vmem_limit,
                                   budget=self._tile_budget)   # (b, nsearch, N, hw_pad)
        corr = corr[:, :, :, :hw].reshape(b, nsearch * N, hw)
        return corr[:, None]                                   # (b, 1, nsearch*N, h*w)


# --------------------------------------------------------------------------- #
# Pure-JAX reference for the coarse offsets (used only for the self-check).
# --------------------------------------------------------------------------- #
def _coarse_offset_ref(ft, fr, dirate, R_m):
    b, c, h, w = ft.shape
    P_m = 2 * R_m + 1
    pad = R_m * dirate
    frp = jnp.pad(fr, ((0, 0), (0, 0), (pad, pad), (pad, pad)))
    rows = []
    for di in range(P_m):
        for dj in range(P_m):
            rs = frp[:, :, di * dirate:di * dirate + h, dj * dirate:dj * dirate + w]
            rows.append(jnp.sum(ft * rs, axis=1))
    corr = jnp.stack(rows, axis=1)                             # (b, P_m*P_m, h, w)
    p = jax.nn.softmax(corr, axis=1)
    idx = jnp.arange(P_m * P_m)
    dx = ((idx % P_m) - R_m).astype(jnp.float32) * dirate
    dy = ((idx // P_m) - R_m).astype(jnp.float32) * dirate
    ox = jnp.sum(p * dx[None, :, None, None], axis=1)
    oy = jnp.sum(p * dy[None, :, None, None], axis=1)
    return jnp.stack([ox, oy], axis=1)


# --------------------------------------------------------------------------- #
if __name__ == "__main__":
    key = jax.random.PRNGKey(0)
    b, c, h, w = 2, 8, 16, 16
    k1, k2, k3 = jax.random.split(key, 3)
    feats_t = jax.random.normal(k1, (b, c, h, w), jnp.float32)
    feats_r = [jax.random.normal(k2, (b, c, h, w), jnp.float32),
               jax.random.normal(k3, (b, c, h, w), jnp.float32)]
    ref_index = [0, 20]     # both "far" references (current_ind - x > 15)
    current_ind = 40        # -> dirates [3, 2]

    model = Colorizer(R=6, C=c)
    out = model.forward(feats_r, feats_t, None, ref_index, current_ind)
    out = jax.block_until_ready(out)

    P = model.P
    N = P * P
    nsearch = 2
    assert out.shape == (b, 1, nsearch * N, h * w), out.shape
    assert bool(jnp.all(jnp.isfinite(out)))
    # softmax over dim 2 must sum to 1 per pixel
    assert bool(jnp.allclose(jnp.sum(out, axis=2), 1.0, atol=1e-4))

    # ---- correctness checks against a pure-JAX reference --------------------
    dirates = [min(4, (current_ind - x) // 15 + 1)
               for x in ref_index if current_ind - x > 15]
    segs = []
    for si in range(nsearch):
        fr32 = feats_r[si].astype(jnp.float32)
        off_pal = model._coarse_offset(feats_t.astype(jnp.float32), fr32, dirates[si])
        off_ref = _coarse_offset_ref(feats_t.astype(jnp.float32), fr32, dirates[si],
                                     model.memory_patch_R)
        assert bool(jnp.allclose(off_pal, off_ref, atol=5e-3)), "coarse offsets mismatch"
        col = deform_im2col(fr32, jnp.transpose(off_pal, (0, 2, 3, 1)), P)  # f32 columns
        segs.append(jnp.sum(feats_t[:, :, None] * col, axis=1).reshape(b, N, h * w))
    ref_pixel = jax.nn.softmax(jnp.concatenate(segs, axis=1), axis=1)[:, None]
    # bf16 column stream in the Pallas path -> loose tolerance
    assert bool(jnp.allclose(out, ref_pixel, atol=8e-2)), "pixel correlation mismatch"

    print("KERNEL_OK")
</pallas_src>

<mosaic_0001>
module attributes {stable_mosaic.version = 11 : i64} {
  func.func @_k(%arg0: memref<8x128xf32, #tpu.memory_space<vmem>>, %arg1: memref<8x128xf32, #tpu.memory_space<vmem>>) attributes {dimension_semantics = [], scalar_prefetch = 0 : i64, scratch_operands = 0 : i64, tpu.core_type = #tpu.core_type<tc>} {
    %c0 = arith.constant 0 : index
    %c0_0 = arith.constant 0 : index
    %0 = vector.load %arg0[%c0, %c0_0] : memref<8x128xf32, #tpu.memory_space<vmem>>, vector<8x128xf32>
    %c1_i32 = arith.constant 1 : i32
    %1 = tpu.dynamic_rotate %0 by %c1_i32 dim 1 : vector<8x128xf32>, i32 -> vector<8x128xf32>
    %c0_1 = arith.constant 0 : index
    %c0_2 = arith.constant 0 : index
    %2 = vector.load %arg1[%c0_1, %c0_2] : memref<8x128xf32, #tpu.memory_space<vmem>>, vector<8x128xf32>
    tpu.vector_store %arg1[%c0_1, %c0_2], %1 {strides = array<i32>} : memref<8x128xf32, #tpu.memory_space<vmem>>, vector<8x128xf32>,
    return
  }
}

</mosaic_0001>

<llo_original>
// kernel: tpu_custom_call.1
$region0: #{tpu_custom_call.1}
  #allocation0 [shape = 'u32[]', space=smem, size = 0x4, offset = 0x4, fixed_abs, tag = 'smem constant byte address 0x4 - core index']
  #allocation1 [shape = 'u32[72,128]{1,0:T(1,128)}', space=vmem, size = 0x9000, scoped, tag = 'internal scratch']
  %s0 = inlined_call_operand.hbm [shape: f32[8,128], index: 0, kind: input, shape index: {}]
  %s1 = inlined_call_operand.hbm [shape: f32[8,128], index: 1, kind: output, shape index: {}]
  %s2 = sld [smem:[#allocation0]]
  $region18: #{tpu_custom_call.1} parent=0
    _
  %s4 = ssub.s32 1, %s2
  %s5 = scalar_select 0, %s4, %s2
  $region1: #{tpu_custom_call.1} parent=0
    #allocation2 [shape = 'u8[4096]{0}', space=vmem, size = 0x1000, scoped, tag = 'input window, operand 0, single buffered']
    #allocation3 [shape = 's32[1]{0}', space=sflag, size = 0x4, scoped, tag = 'scoped memory for tpu_custom_call.1']
    #allocation4 [shape = 's32[1]{0}', space=sflag, size = 0x4, scoped, tag = 'scoped memory for tpu_custom_call.1']
    #allocation5 [shape = 'u8[4096]{0}', space=vmem, size = 0x1000, scoped, tag = 'output window, operand 0, single buffered']
    %6 = vsyncpa [#allocation3], 0
    %7 = vsyncpa [#allocation4], 0
    // Predicated region
    $region2: #{tpu_custom_call.1} parent=1 // pred_check
      _
    $region3: #{tpu_custom_call.1} parent=1 // pred_check_branch
      %9 = sbr.rel (0) target = $region5
    $region4: #{tpu_custom_call.1} parent=1 // pred_region
      %11 = vsyncadd [#allocation3], 0
      %s13 = sshll.u32 %s0, 4
      %s14 = int_to_ptr.hbm [resolvable:$true] %s13
      %s15 = sshll.u32 [#allocation2], 4
      %s16 = int_to_ptr.vmem [resolvable:$true] %s15
      %18 = dma.hbm_to_vmem [thread:$0]  %s14, 128, %s16, [#allocation3]
    $region5: #{tpu_custom_call.1} parent=1 // pred_fallthru
      _
    // Predicated region
    $region6: #{tpu_custom_call.1} parent=1 // pred_check
      _
    $region7: #{tpu_custom_call.1} parent=1 // pred_check_branch
      %20 = sbr.rel (0) target = $region9
    $region8: #{tpu_custom_call.1} parent=1 // pred_region
      %22 = dma.done [#allocation3], 128
    $region9: #{tpu_custom_call.1} parent=1 // pred_fallthru
      _
    %v23 = vld [vmem:[#allocation2] sm:$0xff]
    %24 = vrot.lane.b32.xlu0 %v23, 1
    %v25 = vpop.permute.xlu0 %24
    %26 = vst [vmem:[#allocation5] sm:$0xff] %v25
    // Predicated region
    $region10: #{tpu_custom_call.1} parent=1 // pred_check
      _
    $region11: #{tpu_custom_call.1} parent=1 // pred_check_branch
      %28 = sbr.rel (0) target = $region13
    $region12: #{tpu_custom_call.1} parent=1 // pred_region
      %30 = vsyncadd [#allocation4], 0
      %s32 = sshll.u32 [#allocation5], 4
      %s33 = int_to_ptr.vmem [resolvable:$true] %s32
      %s34 = sshll.u32 %s1, 4
      %s35 = int_to_ptr.hbm [resolvable:$true] %s34
      %37 = dma.vmem_to_hbm [thread:$0]  %s33, 128, %s35, [#allocation4]
    $region13: #{tpu_custom_call.1} parent=1 // pred_fallthru
      _
    // Predicated region
    $region14: #{tpu_custom_call.1} parent=1 // pred_check
      _
    $region15: #{tpu_custom_call.1} parent=1 // pred_check_branch
      %39 = sbr.rel (0) target = $region17
    $region16: #{tpu_custom_call.1} parent=1 // pred_region
      %41 = dma.done [#allocation4], 128
    $region17: #{tpu_custom_call.1} parent=1 // pred_fallthru
      _
    %42 = vsyncpa [#allocation3], 1
    %43 = vsyncpa [#allocation4], 1

</llo_original>
